<compile_context>
chip_gen: v7x
topology: tpu7x:2x2x1
jax: 0.10.0
libtpu: 0.0.40
codegen_flags: <defaults>
</compile_context>

<pallas_src>
import jax
import jax.numpy as jnp
from jax.experimental import pallas as pl
from jax.experimental.pallas import tpu as pltpu


def _layernorm_kernel(x_ref, w_ref, b_ref, o_ref):
    # x_ref: (TILE_ROWS, C), w_ref/b_ref: (1, C), o_ref: (TILE_ROWS, C)
    x = x_ref[...].astype(jnp.float32)
    mu = jnp.mean(x, axis=-1, keepdims=True)
    xc = x - mu
    # unbiased=False in the PyTorch module -> population variance (divide by C).
    var = jnp.mean(xc * xc, axis=-1, keepdims=True)
    inv = jax.lax.rsqrt(var + 1e-5)                       # EUP, off the VALU path
    w = w_ref[...].astype(jnp.float32)
    b = b_ref[...].astype(jnp.float32)
    o_ref[...] = (xc * inv * w + b).astype(o_ref.dtype)


def _pick_tile_rows(rows, C, itemsize, *,
                    vmem_budget_bytes=16 * 1024 * 1024,
                    max_tile=2048,
                    min_grid_steps=2):
    """Largest multiple-of-8 row tile that fits the VMEM budget.

    Per-row cost estimate (bytes):
      double-buffered input tile + double-buffered output tile (kernel dtype)
      + ~4 f32 temporaries (upcast x, centered xc, the product xc*xc / y,
        reduction scratch).
    Capped at max_tile, and at rows/min_grid_steps so a v7x chip (2 TCs) still
    gets at least a couple of grid steps to shard across cores.
    """
    per_row = 2 * 2 * C * itemsize + 4 * C * 4
    tile = max(8, vmem_budget_bytes // max(per_row, 1))
    tile = min(tile, max_tile)
    if tile >= rows:
        return rows  # full-extent block is always a legal block shape
    tile = min(tile, max(8, -(-rows // min_grid_steps)))
    tile = max(8, (tile // 8) * 8)
    return tile


def with_bias_layernorm(x, weight, bias, *, tile_rows=None):
    """x: (..., C); weight, bias: (C,). Returns (x - mu)/sqrt(var + 1e-5)*w + b."""
    orig_shape = x.shape
    C = orig_shape[-1]
    assert weight.shape == (C,) and bias.shape == (C,)
    rows = 1
    for d in orig_shape[:-1]:
        rows *= d

    x2 = x.reshape(rows, C)
    w2 = weight.reshape(1, C)
    b2 = bias.reshape(1, C)

    if tile_rows is None:
        tile_rows = _pick_tile_rows(rows, C, x2.dtype.itemsize)
    tile_rows = min(int(tile_rows), rows)
    if tile_rows < rows:
        # blocks smaller than the full extent need a multiple-of-8 sublane dim
        tile_rows = max(8, (tile_rows // 8) * 8)

    grid = (pl.cdiv(rows, tile_rows),)  # ragged last block: OOB writes are masked

    out = pl.pallas_call(
        _layernorm_kernel,
        out_shape=jax.ShapeDtypeStruct((rows, C), x.dtype),
        grid_spec=pltpu.PrefetchScalarGridSpec(
            num_scalar_prefetch=0,
            grid=grid,
            in_specs=[
                pl.BlockSpec((tile_rows, C), lambda i: (i, 0)),
                # constant block index -> weight/bias fetched once, stay resident
                pl.BlockSpec((1, C), lambda i: (0, 0)),
                pl.BlockSpec((1, C), lambda i: (0, 0)),
            ],
            out_specs=pl.BlockSpec((tile_rows, C), lambda i: (i, 0)),
        ),
        compiler_params=pltpu.CompilerParams(
            dimension_semantics=("parallel",),
            vmem_limit_bytes=64 * 1024 * 1024,
        ),
    )(x2, w2, b2)

    return out.reshape(orig_shape)


def reference_layernorm(x, weight, bias):
    x32 = x.astype(jnp.float32)
    mu = jnp.mean(x32, axis=-1, keepdims=True)
    sigma = jnp.mean((x32 - mu) ** 2, axis=-1, keepdims=True)
    y = (x32 - mu) / jnp.sqrt(sigma + 1e-5) * weight + bias
    return y.astype(x.dtype)


if __name__ == "__main__":
    key = jax.random.PRNGKey(0)

    # --- main demo: lane-dense C (multiple of 128), auto tile_rows -----------
    B, N, C = 2, 8, 128
    k1, k2, k3, k4 = jax.random.split(key, 4)
    x = jax.random.normal(k1, (B, N, C), dtype=jnp.float32)
    weight = jnp.ones((C,), dtype=jnp.float32)   # module default init
    bias = jnp.zeros((C,), dtype=jnp.float32)

    y = jax.block_until_ready(with_bias_layernorm(x, weight, bias))
    y_ref = reference_layernorm(x, weight, bias)
    assert jnp.allclose(y, y_ref, atol=1e-5, rtol=1e-5), "mismatch (default init)"

    # non-trivial affine params (learned-parameter path)
    weight2 = jax.random.normal(k2, (C,), dtype=jnp.float32)
    bias2 = jax.random.normal(k3, (C,), dtype=jnp.float32)
    y2 = jax.block_until_ready(with_bias_layernorm(x, weight2, bias2))
    y2_ref = reference_layernorm(x, weight2, bias2)
    assert jnp.allclose(y2, y2_ref, atol=1e-4, rtol=1e-4), "mismatch (affine)"

    # --- ragged-grid path: rows not divisible by tile_rows, no padding -------
    x_r = jax.random.normal(k4, (3, 5, C), dtype=jnp.float32)  # rows = 15
    y_r = jax.block_until_ready(with_bias_layernorm(x_r, weight2, bias2, tile_rows=8))
    y_r_ref = reference_layernorm(x_r, weight2, bias2)
    assert jnp.allclose(y_r, y_r_ref, atol=1e-4, rtol=1e-4), "mismatch (ragged grid)"

    # --- bf16 I/O path: math stays f32 in-kernel ------------------------------
    x_bf = jax.random.normal(k1, (2, 16, C), dtype=jnp.float32).astype(jnp.bfloat16)
    y_bf = jax.block_until_ready(
        with_bias_layernorm(x_bf, weight2.astype(jnp.bfloat16), bias2.astype(jnp.bfloat16)))
    y_bf_ref = reference_layernorm(x_bf, weight2, bias2)
    assert jnp.allclose(y_bf.astype(jnp.float32), y_bf_ref.astype(jnp.float32),
                        atol=3e-2, rtol=3e-2), "mismatch (bf16)"

    # --- small C (< 128) still correct (masked stores; not the perf path) ----
    C_s = 32
    x_s = jax.random.normal(k1, (2, 8, C_s), dtype=jnp.float32)
    w_s = jnp.ones((C_s,), dtype=jnp.float32)
    b_s = jnp.zeros((C_s,), dtype=jnp.float32)
    y_s = jax.block_until_ready(with_bias_layernorm(x_s, w_s, b_s))
    y_s_ref = reference_layernorm(x_s, w_s, b_s)
    assert jnp.allclose(y_s, y_s_ref, atol=1e-5, rtol=1e-5), "mismatch (small C)"

    print("KERNEL_OK")
</pallas_src>

<mosaic_0001>
module attributes {stable_mosaic.version = 11 : i64} {
  func.func @_layernorm_kernel(%arg0: i32, %arg1: memref<16x128xf32, #tpu.memory_space<vmem>>, %arg2: memref<1x128xf32, #tpu.memory_space<vmem>>, %arg3: memref<1x128xf32, #tpu.memory_space<vmem>>, %arg4: memref<16x128xf32, #tpu.memory_space<vmem>>) attributes {dimension_semantics = [#tpu.dimension_semantics<parallel>], iteration_bounds = array<i64: 1>, scalar_prefetch = 0 : i64, scratch_operands = 0 : i64, tpu.core_type = #tpu.core_type<tc>, window_params = [{transform_indices = @transform_0, window_bounds = array<i64: 16, 128>}, {pipeline_mode = #tpu.pipeline_mode<synchronous>, transform_indices = @transform_1, window_bounds = array<i64: 1, 128>}, {pipeline_mode = #tpu.pipeline_mode<synchronous>, transform_indices = @transform_2, window_bounds = array<i64: 1, 128>}, {transform_indices = @transform_3, window_bounds = array<i64: 16, 128>}]} {
    %c0 = arith.constant 0 : index
    %c0_0 = arith.constant 0 : index
    %0 = vector.load %arg1[%c0, %c0_0] : memref<16x128xf32, #tpu.memory_space<vmem>>, vector<16x128xf32>
    %cst = arith.constant dense<0.000000e+00> : vector<16xf32>
    %1 = vector.multi_reduction <add>, %0, %cst [1] : vector<16x128xf32> to vector<16xf32>
    %2 = vector.shape_cast %1 : vector<16xf32> to vector<16x1xf32>
    %cst_1 = arith.constant 1.280000e+02 : f32
    %3 = vector.broadcast %cst_1 : f32 to vector<16x1xf32>
    %4 = arith.divf %2, %3 : vector<16x1xf32>
    %5 = vector.broadcast %4 : vector<16x1xf32> to vector<16x128xf32>
    %6 = arith.subf %0, %5 : vector<16x128xf32>
    %7 = arith.mulf %6, %6 : vector<16x128xf32>
    %cst_2 = arith.constant dense<0.000000e+00> : vector<16xf32>
    %8 = vector.multi_reduction <add>, %7, %cst_2 [1] : vector<16x128xf32> to vector<16xf32>
    %9 = vector.shape_cast %8 : vector<16xf32> to vector<16x1xf32>
    %cst_3 = arith.constant 1.280000e+02 : f32
    %10 = vector.broadcast %cst_3 : f32 to vector<16x1xf32>
    %11 = arith.divf %9, %10 : vector<16x1xf32>
    %cst_4 = arith.constant 9.99999974E-6 : f32
    %12 = vector.broadcast %cst_4 : f32 to vector<16x1xf32>
    %13 = arith.addf %11, %12 : vector<16x1xf32>
    %14 = math.rsqrt %13 : vector<16x1xf32>
    %c0_5 = arith.constant 0 : index
    %c0_6 = arith.constant 0 : index
    %15 = vector.load %arg2[%c0_5, %c0_6] : memref<1x128xf32, #tpu.memory_space<vmem>>, vector<1x128xf32>
    %c0_7 = arith.constant 0 : index
    %c0_8 = arith.constant 0 : index
    %16 = vector.load %arg3[%c0_7, %c0_8] : memref<1x128xf32, #tpu.memory_space<vmem>>, vector<1x128xf32>
    %17 = vector.broadcast %14 : vector<16x1xf32> to vector<16x128xf32>
    %18 = arith.mulf %6, %17 : vector<16x128xf32>
    %19 = vector.broadcast %15 : vector<1x128xf32> to vector<16x128xf32>
    %20 = arith.mulf %18, %19 : vector<16x128xf32>
    %21 = vector.broadcast %16 : vector<1x128xf32> to vector<16x128xf32>
    %22 = arith.addf %20, %21 : vector<16x128xf32>
    %c0_9 = arith.constant 0 : index
    %c0_10 = arith.constant 0 : index
    %23 = vector.load %arg4[%c0_9, %c0_10] : memref<16x128xf32, #tpu.memory_space<vmem>>, vector<16x128xf32>
    tpu.vector_store %arg4[%c0_9, %c0_10], %22 {strides = array<i32>} : memref<16x128xf32, #tpu.memory_space<vmem>>, vector<16x128xf32>,
    return
  }
  func.func @transform_0(%arg0: i32) -> (i32, i32) {
    %c0_i32 = arith.constant 0 : i32
    %c0_i32_0 = arith.constant 0 : i32
    return %arg0, %c0_i32 : i32, i32
  }
  func.func @transform_1(%arg0: i32) -> (i32, i32) {
    %c0_i32 = arith.constant 0 : i32
    %c0_i32_0 = arith.constant 0 : i32
    %c0_i32_1 = arith.constant 0 : i32
    return %c0_i32, %c0_i32_0 : i32, i32
  }
  func.func @transform_2(%arg0: i32) -> (i32, i32) {
    %c0_i32 = arith.constant 0 : i32
    %c0_i32_0 = arith.constant 0 : i32
    %c0_i32_1 = arith.constant 0 : i32
    return %c0_i32, %c0_i32_0 : i32, i32
  }
  func.func @transform_3(%arg0: i32) -> (i32, i32) {
    %c0_i32 = arith.constant 0 : i32
    %c0_i32_0 = arith.constant 0 : i32
    return %arg0, %c0_i32 : i32, i32
  }
}

</mosaic_0001>

<llo_original>
// kernel: tpu_custom_call.1
$region0: #{tpu_custom_call.1}
  #allocation0 [shape = 'u32[]', space=smem, size = 0x4, offset = 0x4, fixed_abs, tag = 'smem constant byte address 0x4 - core index']
  #allocation1 [shape = 'u32[144,128]{1,0:T(1,128)}', space=vmem, size = 0x12000, scoped, tag = 'internal scratch']
  %s0 = inlined_call_operand.hbm [shape: f32[16,128], index: 0, kind: input, shape index: {}]
  %s1 = inlined_call_operand.hbm [shape: f32[1,128], index: 1, kind: input, shape index: {}]
  %s2 = inlined_call_operand.hbm [shape: f32[1,128], index: 2, kind: input, shape index: {}]
  %s3 = inlined_call_operand.hbm [shape: f32[16,128], index: 3, kind: output, shape index: {}]
  %s4 = sld [smem:[#allocation0]]
  $region34: #{tpu_custom_call.1} parent=0
    _
  %s6 = ssub.s32 1, %s4
  %s7 = scalar_select 0, %s6, %s4
  $region1: #{tpu_custom_call.1} parent=0
    #allocation2 [shape = 'u8[8192]{0}', space=vmem, size = 0x2000, scoped, tag = 'input window, operand 0, single buffered']
    #allocation3 [shape = 's32[1]{0}', space=sflag, size = 0x4, scoped, tag = 'scoped memory for tpu_custom_call.1']
    #allocation4 [shape = 's32[1]{0}', space=sflag, size = 0x4, scoped, tag = 'scoped memory for tpu_custom_call.1']
    #allocation5 [shape = 'u8[512]{0}', space=vmem, size = 0x400, scoped, tag = 'input window, operand 1, single buffered']
    #allocation6 [shape = 's32[1]{0}', space=sflag, size = 0x4, scoped, tag = 'scoped memory for tpu_custom_call.1']
    #allocation7 [shape = 'u8[512]{0}', space=vmem, size = 0x400, scoped, tag = 'input window, operand 2, single buffered']
    #allocation8 [shape = 'u8[8192]{0}', space=vmem, size = 0x2000, scoped, tag = 'output window, operand 0, single buffered']
    %8 = vsyncpa [#allocation3], 0
    %9 = vsyncpa [#allocation6], 0
    %10 = vsyncpa [#allocation4], 0
    // Predicated region
    $region2: #{tpu_custom_call.1} parent=1 // pred_check
      _
    $region3: #{tpu_custom_call.1} parent=1 // pred_check_branch
      %12 = sbr.rel (0) target = $region5
    $region4: #{tpu_custom_call.1} parent=1 // pred_region
      %s14 = ssub.s32 256, 256
      %15 = vsyncadd [#allocation3], %s14
      %s16 = sshll.u32 [#allocation2], 4
      %s17 = int_to_ptr.vmem [resolvable:$true] %s16
      %22 = dma.hbm_to_vmem [thread:$0]  %s0, 256, %s17, [#allocation3], 128, 128, 8
    $region5: #{tpu_custom_call.1} parent=1 // pred_fallthru
      _
    // Predicated region
    $region6: #{tpu_custom_call.1} parent=1 // pred_check
      _
    $region7: #{tpu_custom_call.1} parent=1 // pred_check_branch
      %24 = sbr.rel (0) target = $region9
    $region8: #{tpu_custom_call.1} parent=1 // pred_region
      %s26 = ssub.s32 16, 16
      %27 = vsyncadd [#allocation6], %s26
      %s29 = sshll.u32 [#allocation5], 4
      %s30 = int_to_ptr.vmem [resolvable:$true] %s29
      %32 = dma.hbm_to_vmem [thread:$0]  %s1, 16, %s30, [#allocation6]
    $region9: #{tpu_custom_call.1} parent=1 // pred_fallthru
      _
    // Predicated region
    $region10: #{tpu_custom_call.1} parent=1 // pred_check
      _
    $region11: #{tpu_custom_call.1} parent=1 // pred_check_branch
      %34 = sbr.rel (0) target = $region13
    $region12: #{tpu_custom_call.1} parent=1 // pred_region
      %s36 = ssub.s32 16, 16
      %37 = vsyncadd [#allocation6], %s36
      %s39 = sshll.u32 [#allocation7], 4
      %s40 = int_to_ptr.vmem [resolvable:$true] %s39
      %42 = dma.hbm_to_vmem [thread:$0]  %s2, 16, %s40, [#allocation6]
    $region13: #{tpu_custom_call.1} parent=1 // pred_fallthru
      _
    // Predicated region
    $region14: #{tpu_custom_call.1} parent=1 // pred_check
      _
    $region15: #{tpu_custom_call.1} parent=1 // pred_check_branch
      %44 = sbr.rel (0) target = $region17
    $region16: #{tpu_custom_call.1} parent=1 // pred_region
      %45 = dma.done [#allocation3], 256
    $region17: #{tpu_custom_call.1} parent=1 // pred_fallthru
      _
    // Predicated region
    $region18: #{tpu_custom_call.1} parent=1 // pred_check
      _
    $region19: #{tpu_custom_call.1} parent=1 // pred_check_branch
      %47 = sbr.rel (0) target = $region21
    $region20: #{tpu_custom_call.1} parent=1 // pred_region
      %48 = dma.done [#allocation6], 16
    $region21: #{tpu_custom_call.1} parent=1 // pred_fallthru
      _
    // Predicated region
    $region22: #{tpu_custom_call.1} parent=1 // pred_check
      _
    $region23: #{tpu_custom_call.1} parent=1 // pred_check_branch
      %50 = sbr.rel (0) target = $region25
    $region24: #{tpu_custom_call.1} parent=1 // pred_region
      %51 = dma.done [#allocation6], 16
    $region25: #{tpu_custom_call.1} parent=1 // pred_fallthru
      _
    %v52 = vld [vmem:[#allocation2] sm:$0xff]
    %v53 = vld [vmem:[#allocation2 + $0x8] sm:$0xff]
    %54 = vadd.xlane.f32.xlu0 %v52
    %v55 = vpop.xlane.xlu0 %54
    %56 = vadd.xlane.f32.xlu0 %v53
    %v57 = vpop.xlane.xlu0 %56
    %v58 = vrcp.pop 128.0
    %v59 = vmul.f32 %v55, %v58
    %v60 = vmul.f32 %v57, %v58
    %v61 = vsub.f32 %v52, %v59
    %v62 = vsub.f32 %v53, %v60
    %v63 = vmul.f32 %v61, %v61
    %v64 = vmul.f32 %v62, %v62
    %65 = vadd.xlane.f32.xlu0 %v63
    %v66 = vpop.xlane.xlu0 %65
    %67 = vadd.xlane.f32.xlu0 %v64
    %v68 = vpop.xlane.xlu0 %67
    %v69 = vmul.f32 %v66, %v58
    %v70 = vmul.f32 %v68, %v58
    %v71 = vadd.f32 %v69, 1e-05
    %v72 = vadd.f32 %v70, 1e-05
    %v73 = vrsqrt.pop %v71
    %v74 = vrsqrt.pop %v72
    %v75 = vld [vmem:[#allocation5] sm:$0x1]
    %v76 = vld [vmem:[#allocation7] sm:$0x1]
    %v77 = vmul.f32 %v61, %v73
    %v78 = vmul.f32 %v62, %v74
    %v80 = vlaneseq
    %v81 = vshrl.u32 %v80, 7
    %v82 = vsub.s32 0, %v81
    %v83 = vrot.slane %v75, %v82
    %v85 = vmul.f32 %v77, %v83
    %v86 = vmul.f32 %v78, %v83
    %v88 = vlaneseq
    %v89 = vshrl.u32 %v88, 7
    %v90 = vsub.s32 0, %v89
    %v91 = vrot.slane %v76, %v90
    %v93 = vadd.f32 %v85, %v91
    %v94 = vadd.f32 %v86, %v91
    %95 = vst [vmem:[#allocation8] sm:$0xff] %v93
    %96 = vst [vmem:[#allocation8 + $0x8] sm:$0xff] %v94
    // Predicated region
    $region26: #{tpu_custom_call.1} parent=1 // pred_check
      _
    $region27: #{tpu_custom_call.1} parent=1 // pred_check_branch
      %98 = sbr.rel (0) target = $region29
    $region28: #{tpu_custom_call.1} parent=1 // pred_region
      %s100 = ssub.s32 256, 256
      %101 = vsyncadd [#allocation4], %s100
      %s102 = sshll.u32 [#allocation8], 4
      %s103 = int_to_ptr.vmem [resolvable:$true] %s102
      %108 = dma.vmem_to_hbm [thread:$0]  %s103, 256, %s3, [#allocation4], 128, 128, 8
    $region29: #{tpu_custom_call.1} parent=1 // pred_fallthru
      _
    // Predicated region
    $region30: #{tpu_custom_call.1} parent=1 // pred_check
      _
    $region31: #{tpu_custom_call.1} parent=1 // pred_check_branch
      %110 = sbr.rel (0) target = $region33
    $region32: #{tpu_custom_call.1} parent=1 // pred_region
      %111 = dma.done [#allocation4], 256
    $region33: #{tpu_custom_call.1} parent=1 // pred_fallthru
      _
    %112 = vsyncpa [#allocation3], 1
    %113 = vsyncpa [#allocation6], 1
    %114 = vsyncpa [#allocation4], 1

</llo_original>
